<compile_context>
chip_gen: v5e
topology: v5e:2x2
jax: 0.10.0
libtpu: 0.0.40
codegen_flags: <defaults>
</compile_context>

<pallas_src>
import jax
import jax.numpy as jnp
from jax.experimental import pallas as pl
from jax.experimental.pallas import tpu as pltpu


def _bilinear_matrix(n_in: int, n_out: int) -> jnp.ndarray:
    """Dense (n_out, n_in) interpolation matrix for bilinear, align_corners=True."""
    if n_in == 1:
        return jnp.ones((n_out, 1), dtype=jnp.float32)
    src = jnp.arange(n_out, dtype=jnp.float32) * (n_in - 1) / (n_out - 1)
    lo = jnp.clip(jnp.floor(src).astype(jnp.int32), 0, n_in - 2)
    frac = src - lo.astype(jnp.float32)
    rows = jnp.arange(n_out)
    m = jnp.zeros((n_out, n_in), dtype=jnp.float32)
    m = m.at[rows, lo].set(1.0 - frac)
    m = m.at[rows, lo + 1].add(frac)
    return m


def _outconv_kernel(x_ref, w_ref, b_ref, a_ref, o_ref):
    # x_ref: (Bn*C_in, S) f32, w_ref: (Bn*C_out, Bn*C_in) f32 (block-diag),
    # b_ref: (Bn*C_out, 1) f32, a_ref: (S, S2) bf16, o_ref: (Bn*C_out, S2) f32.
    # 1x1 conv == one small 2-D matmul against the block-diagonal weight (K is tiny, so
    # the f32 MXU passes are negligible next to the interp matmul; keeps full precision).
    z = jnp.dot(w_ref[...], x_ref[...], preferred_element_type=jnp.float32)
    z = z + b_ref[...]                                    # bias broadcast along lanes
    # Bilinear x2 upsample: one lane-dense bf16 MXU matmul (K = H*W, N = H2*W2).
    o_ref[...] = jnp.dot(z.astype(jnp.bfloat16), a_ref[...],
                         preferred_element_type=jnp.float32).astype(o_ref.dtype)


def _pick_block_n(n, c_in, c_out, s, s2, budget_bytes):
    """Largest divisor of n that fits the VMEM budget while keeping >= 2 grid steps."""
    best = 1
    for bn in range(1, n + 1):
        if n % bn:
            continue
        if n > 1 and (n // bn) < 2:        # >=2 steps: v7x megacore + DMA/compute overlap
            continue
        per = ((bn * c_in * s * 4) * 2                 # f32 input block, double-buffered
               + (bn * c_out * s2 * 4) * 2             # f32 output block, double-buffered
               + bn * c_out * s * 6                    # z (f32) + its bf16 copy
               + (bn * c_out) * (bn * c_in) * 4)       # block-diag weight
        if per <= budget_bytes:
            best = max(best, bn)
    return best


def out_conv(x, weight, bias, *, block_n=None):
    """x: (N, C_in, H, W) f32; weight: (C_out, C_in); bias: (C_out,) -> (N, C_out, 2H, 2W)."""
    N, C_in, H, W = x.shape
    C_out = weight.shape[0]
    H2, W2 = 2 * H, 2 * W
    S, S2 = H * W, H2 * W2
    out_dtype = x.dtype

    # Generation-aware VMEM budgets (v7x: 64 MiB/TC, v5e/v6e: 128 MiB), ~25% headroom.
    vmem_cap = 64 * 1024 * 1024
    try:
        vmem_cap = int(getattr(pltpu.get_tpu_info(), "vmem_capacity_bytes", vmem_cap))
    except Exception:
        pass
    block_budget = min(24 * 1024 * 1024, vmem_cap // 4)

    if block_n is None:
        block_n = _pick_block_n(N, C_in, C_out, S, S2, block_budget)
    assert N % block_n == 0, (N, block_n)
    n_blocks = N // block_n

    # Wrapper-side constants (all tiny; built once per shape).
    a_kron_t = jnp.kron(_bilinear_matrix(H, H2),
                        _bilinear_matrix(W, W2)).T.astype(jnp.bfloat16)   # (S, S2)
    w_bd = jnp.kron(jnp.eye(block_n, dtype=jnp.float32),
                    weight.astype(jnp.float32))                           # (bn*C_out, bn*C_in)
    b_bd = jnp.tile(bias.astype(jnp.float32), (block_n,)).reshape(block_n * C_out, 1)

    # Free, contiguous reshape: fold channels (and block batch) into the sublane dim.
    x_slab = x.reshape(n_blocks, block_n * C_in, S)                       # stays f32

    const_bytes = 2 * (S * S2 * 2) + 2 * (w_bd.size * 4) + 2 * (b_bd.size * 4)
    blk_bytes = ((block_n * C_in * S * 4) * 2 + (block_n * C_out * S2 * 4) * 2
                 + block_n * C_out * S * 6)
    vmem_limit = int(min(vmem_cap * 3 // 4,
                         max(32 * 1024 * 1024, 2 * (const_bytes + blk_bytes))))

    flops = 2 * N * block_n * C_out * C_in * S + 2 * N * C_out * S * S2
    bytes_accessed = (N * C_in * S * 4 + N * C_out * S2 * 4
                      + S * S2 * 2 + w_bd.size * 4 + b_bd.size * 4)
    cost = pl.CostEstimate(flops=flops, transcendentals=0, bytes_accessed=bytes_accessed)

    out_slab = pl.pallas_call(
        _outconv_kernel,
        out_shape=jax.ShapeDtypeStruct((n_blocks, block_n * C_out, S2), out_dtype),
        grid_spec=pltpu.PrefetchScalarGridSpec(
            num_scalar_prefetch=0,
            grid=(n_blocks,),
            in_specs=[
                pl.BlockSpec((None, block_n * C_in, S), lambda n: (n, 0, 0)),
                pl.BlockSpec((block_n * C_out, block_n * C_in), lambda n: (0, 0)),
                pl.BlockSpec((block_n * C_out, 1), lambda n: (0, 0)),
                pl.BlockSpec((S, S2), lambda n: (0, 0)),
            ],
            out_specs=pl.BlockSpec((None, block_n * C_out, S2), lambda n: (n, 0, 0)),
        ),
        compiler_params=pltpu.CompilerParams(
            dimension_semantics=("parallel",),
            vmem_limit_bytes=vmem_limit),
        cost_estimate=cost,
    )(x_slab, w_bd, b_bd, a_kron_t)

    # Free contiguous reshape back to NCHW.
    return out_slab.reshape(N, C_out, H2, W2)


def out_conv_reference(x, weight, bias):
    """Pure-JAX f32 reference: 1x1 conv + bilinear x2 upsample, align_corners=True."""
    N, C_in, H, W = x.shape
    z = jnp.einsum('oc,nchw->nohw', weight, x) + bias[None, :, None, None]
    a_h = _bilinear_matrix(H, 2 * H)
    a_w = _bilinear_matrix(W, 2 * W)
    return jnp.einsum('ih,nchw,jw->ncij', a_h, z, a_w)


if __name__ == "__main__":
    # Small shapes consistent with the module's forward.
    N, C_in, C_out, H, W = 2, 4, 3, 16, 16

    key = jax.random.PRNGKey(0)
    kx, kw, kb = jax.random.split(key, 3)

    x = jax.random.normal(kx, (N, C_in, H, W), dtype=jnp.float32)
    # Deterministic param init (Kaiming-uniform-style bound, like nn.Conv2d default).
    bound = 1.0 / (C_in ** 0.5)
    weight = jax.random.uniform(kw, (C_out, C_in), jnp.float32, -bound, bound)
    bias = jax.random.uniform(kb, (C_out,), jnp.float32, -bound, bound)

    out = jax.block_until_ready(out_conv(x, weight, bias))
    ref = out_conv_reference(x, weight, bias)

    assert out.shape == (N, C_out, 2 * H, 2 * W), out.shape
    # bf16 interp operands with f32 accumulation vs f32 reference -> loosened tolerance.
    max_err = float(jnp.max(jnp.abs(out - ref)))
    assert jnp.allclose(out, ref, atol=3e-2, rtol=3e-2), f"mismatch vs reference: {max_err}"

    print("KERNEL_OK")
</pallas_src>

<mosaic_0001>
module attributes {stable_mosaic.version = 11 : i64} {
  func.func @_outconv_kernel(%arg0: i32, %arg1: memref<1x4x256xf32, #tpu.memory_space<vmem>>, %arg2: memref<3x4xf32, #tpu.memory_space<vmem>>, %arg3: memref<3x1xf32, #tpu.memory_space<vmem>>, %arg4: memref<256x1024xbf16, #tpu.memory_space<vmem>>, %arg5: memref<1x3x1024xf32, #tpu.memory_space<vmem>>) attributes {dimension_semantics = [#tpu.dimension_semantics<parallel>], iteration_bounds = array<i64: 2>, scalar_prefetch = 0 : i64, scratch_operands = 0 : i64, tpu.core_type = #tpu.core_type<tc>, window_params = [{transform_indices = @transform_0, window_bounds = array<i64: 1, 4, 256>}, {pipeline_mode = #tpu.pipeline_mode<synchronous>, transform_indices = @transform_1, window_bounds = array<i64: 3, 4>}, {pipeline_mode = #tpu.pipeline_mode<synchronous>, transform_indices = @transform_2, window_bounds = array<i64: 3, 1>}, {pipeline_mode = #tpu.pipeline_mode<synchronous>, transform_indices = @transform_3, window_bounds = array<i64: 256, 1024>}, {transform_indices = @transform_4, window_bounds = array<i64: 1, 3, 1024>}]} {
    %c0 = arith.constant 0 : index
    %c0_0 = arith.constant 0 : index
    %0 = vector.load %arg2[%c0, %c0_0] : memref<3x4xf32, #tpu.memory_space<vmem>>, vector<3x4xf32>
    %c0_1 = arith.constant 0 : index
    %c0_2 = arith.constant 0 : index
    %c0_3 = arith.constant 0 : index
    %1 = vector.load %arg1[%c0_1, %c0_2, %c0_3] : memref<1x4x256xf32, #tpu.memory_space<vmem>>, vector<1x4x256xf32>
    %2 = vector.shape_cast %1 : vector<1x4x256xf32> to vector<4x256xf32>
    %cst = arith.constant dense<0.000000e+00> : vector<3x256xf32>
    %3 = tpu.matmul %0, %2, %cst {dimension_numbers = #tpu.dot_dimension_numbers<[1], [0], [0], [1], [0, 0, 1, 1], [], []>} : vector<3x4xf32>, vector<4x256xf32>, vector<3x256xf32> -> vector<3x256xf32>
    %c0_4 = arith.constant 0 : index
    %c0_5 = arith.constant 0 : index
    %4 = vector.load %arg3[%c0_4, %c0_5] : memref<3x1xf32, #tpu.memory_space<vmem>>, vector<3x1xf32>
    %5 = vector.broadcast %4 : vector<3x1xf32> to vector<3x256xf32>
    %6 = arith.addf %3, %5 : vector<3x256xf32>
    %7 = arith.truncf %6 : vector<3x256xf32> to vector<3x256xbf16>
    %c0_6 = arith.constant 0 : index
    %c0_7 = arith.constant 0 : index
    %8 = vector.load %arg4[%c0_6, %c0_7] : memref<256x1024xbf16, #tpu.memory_space<vmem>>, vector<256x1024xbf16>
    %cst_8 = arith.constant dense<0.000000e+00> : vector<3x1024xf32>
    %9 = tpu.matmul %7, %8, %cst_8 {dimension_numbers = #tpu.dot_dimension_numbers<[1], [0], [0], [1], [0, 0, 1, 1], [], []>} : vector<3x256xbf16>, vector<256x1024xbf16>, vector<3x1024xf32> -> vector<3x1024xf32>
    %c0_9 = arith.constant 0 : index
    %c0_10 = arith.constant 0 : index
    %c0_11 = arith.constant 0 : index
    %10 = vector.load %arg5[%c0_9, %c0_10, %c0_11] : memref<1x3x1024xf32, #tpu.memory_space<vmem>>, vector<1x3x1024xf32>
    %11 = vector.shape_cast %10 : vector<1x3x1024xf32> to vector<3x1024xf32>
    %12 = vector.shape_cast %9 : vector<3x1024xf32> to vector<1x3x1024xf32>
    tpu.vector_store %arg5[%c0_9, %c0_10, %c0_11], %12 {strides = array<i32>} : memref<1x3x1024xf32, #tpu.memory_space<vmem>>, vector<1x3x1024xf32>,
    return
  }
  func.func @transform_0(%arg0: i32) -> (i32, i32, i32) {
    %c0_i32 = arith.constant 0 : i32
    %c0_i32_0 = arith.constant 0 : i32
    %c0_i32_1 = arith.constant 0 : i32
    return %arg0, %c0_i32, %c0_i32_0 : i32, i32, i32
  }
  func.func @transform_1(%arg0: i32) -> (i32, i32) {
    %c0_i32 = arith.constant 0 : i32
    %c0_i32_0 = arith.constant 0 : i32
    %c0_i32_1 = arith.constant 0 : i32
    return %c0_i32, %c0_i32_0 : i32, i32
  }
  func.func @transform_2(%arg0: i32) -> (i32, i32) {
    %c0_i32 = arith.constant 0 : i32
    %c0_i32_0 = arith.constant 0 : i32
    %c0_i32_1 = arith.constant 0 : i32
    return %c0_i32, %c0_i32_0 : i32, i32
  }
  func.func @transform_3(%arg0: i32) -> (i32, i32) {
    %c0_i32 = arith.constant 0 : i32
    %c0_i32_0 = arith.constant 0 : i32
    %c0_i32_1 = arith.constant 0 : i32
    return %c0_i32, %c0_i32_0 : i32, i32
  }
  func.func @transform_4(%arg0: i32) -> (i32, i32, i32) {
    %c0_i32 = arith.constant 0 : i32
    %c0_i32_0 = arith.constant 0 : i32
    %c0_i32_1 = arith.constant 0 : i32
    return %arg0, %c0_i32, %c0_i32_0 : i32, i32, i32
  }
}

</mosaic_0001>

<llo_original>
// kernel: tpu_custom_call.1
$region0: #{tpu_custom_call.1}
  #allocation0 [shape = 'u32[]', space=smem, size = 0x4, offset = 0x4, fixed_abs, tag = 'smem constant byte address 0x4 - core index']
  #allocation1 [shape = 'u32[72,128]{1,0:T(1,128)}', space=vmem, size = 0x9000, scoped, tag = 'internal scratch']
  %s0 = inlined_call_operand.hbm [shape: f32[2,4,256], index: 0, kind: input, shape index: {}]
  %s1 = inlined_call_operand.vmem [shape: f32[3,4], index: 1, kind: input, shape index: {}]
  %s2 = inlined_call_operand.vmem [shape: f32[3,1], index: 2, kind: input, shape index: {}]
  %s3 = inlined_call_operand.hbm [shape: bf16[256,1024], index: 3, kind: input, shape index: {}]
  %s4 = inlined_call_operand.vmem [shape: f32[2,3,1024], index: 4, kind: output, shape index: {}]
  %s5 = sld [smem:[#allocation0]]
  $region57: #{tpu_custom_call.1} parent=0
    _
  %s7 = ssub.s32 1, %s5
  %s8 = scalar_select 0, %s7, %s5
  $region1: #{tpu_custom_call.1} parent=0
    #allocation2 [shape = 'u8[8192]{0}', space=vmem, size = 0x2000, scoped, tag = 'input window, operand 0']
    #allocation3 [shape = 's32[2]{0}', space=sflag, size = 0x8, scoped, tag = 'scoped memory for tpu_custom_call.1']
    #allocation4 [shape = 'u8[524288]{0}', space=vmem, size = 0x80000, scoped, tag = 'input window, operand 3, single buffered']
    #allocation5 [shape = 's32[1]{0}', space=sflag, size = 0x4, scoped, tag = 'scoped memory for tpu_custom_call.1']
    %9 = vsyncpa [#allocation3], 0
    %s10 = scalar_lea.sflag [#allocation3], 1
    %11 = vsyncpa %s10, 0
    %12 = vsyncpa [#allocation5], 0
    loop: start=0, step=1, limit=4
    $region2: #{tpu_custom_call.1} parent=1 // loop_pre_header
      _
    $region3: #{tpu_custom_call.1} parent=1 // loop_header
      %s14 = sphi 0, %s18
      %p15 = scmp.ge.s32.totalorder %s14, 4
      %s24 = sphi 0, %s26
      %s27 = sphi 0, %s24
      %s28 = sphi 0, %s27
      %s44 = sphi 0, %s28
      %s48 = sphi 0, %s48
      %s50 = sphi 0, %s48
      %s51 = sphi 0, %s50
      %s65 = sphi 0, %s51
      %s69 = sphi 0, %s69
      %s71 = sphi 0, %s69
      %s72 = sphi 0, %s71
      %s86 = sphi 0, %s72
      %s90 = sphi 0, %s90
      %s92 = sphi 0, %s90
      %s93 = sphi 0, %s92
      %s107 = sphi 0, %s93
      %s113 = sphi 0, %s115
      %s116 = sphi 0, %s113
      %s117 = sphi 0, %s116
      %s133 = sphi 0, %s117
    $region4: #{tpu_custom_call.1} parent=1 // loop_header_branch
      %17 = sbr.rel (%p15) target = $region8
    $region5: #{tpu_custom_call.1} parent=1 // loop_body
      %s19 = ssub.s32 %s14, 1
      %s20 = ssub.s32 %s14, 2
      %s21 = sadd.s32 %s14, 1
      %s22 = ssub.s32 %s14, %s21
      %p23 = scmp.eq.s32.totalorder %s22, 0
      %s25 = sadd.s32 %s24, 1
      %s26 = scalar_select %p23, %s24, %s25
      %p29 = pneg %p23
      %p30 = scmp.eq.s32.totalorder %s14, 1
      %p31 = por %p29, %p30
      %p32 = scmp.ne.s32.totalorder %s24, %s27
      %p33 = scmp.eq.s32.totalorder %s14, 0
      %p34 = por %p32, %p33
      %p35 = scmp.ne.s32.totalorder %s24, %s27
      %p36 = scmp.eq.s32.totalorder %s19, 1
      %p37 = por %p35, %p36
      %p38 = scmp.ne.s32.totalorder %s27, %s28
      %p39 = scmp.eq.s32.totalorder %s19, 0
      %p40 = por %p38, %p39
      %p41 = scmp.ne.s32.totalorder %s27, %s28
      %p42 = scmp.eq.s32.totalorder %s20, 1
      %p43 = por %p41, %p42
      %p45 = scmp.ne.s32.totalorder %s28, %s44
      %p46 = scmp.eq.s32.totalorder %s20, 0
      %p47 = por %p45, %p46
      %s49 = sadd.s32 %s48, 1
      %p52 = scmp.eq.s32.totalorder %s14, 1
      %p53 = scmp.ne.s32.totalorder %s48, %s50
      %p54 = scmp.eq.s32.totalorder %s14, 0
      %p55 = por %p53, %p54
      %p56 = scmp.ne.s32.totalorder %s48, %s50
      %p57 = scmp.eq.s32.totalorder %s19, 1
      %p58 = por %p56, %p57
      %p59 = scmp.ne.s32.totalorder %s50, %s51
      %p60 = scmp.eq.s32.totalorder %s19, 0
      %p61 = por %p59, %p60
      %p62 = scmp.ne.s32.totalorder %s50, %s51
      %p63 = scmp.eq.s32.totalorder %s20, 1
      %p64 = por %p62, %p63
      %p66 = scmp.ne.s32.totalorder %s51, %s65
      %p67 = scmp.eq.s32.totalorder %s20, 0
      %p68 = por %p66, %p67
      %s70 = sadd.s32 %s69, 1
      %p73 = scmp.eq.s32.totalorder %s14, 1
      %p74 = scmp.ne.s32.totalorder %s69, %s71
      %p75 = scmp.eq.s32.totalorder %s14, 0
      %p76 = por %p74, %p75
      %p77 = scmp.ne.s32.totalorder %s69, %s71
      %p78 = scmp.eq.s32.totalorder %s19, 1
      %p79 = por %p77, %p78
      %p80 = scmp.ne.s32.totalorder %s71, %s72
      %p81 = scmp.eq.s32.totalorder %s19, 0
      %p82 = por %p80, %p81
      %p83 = scmp.ne.s32.totalorder %s71, %s72
      %p84 = scmp.eq.s32.totalorder %s20, 1
      %p85 = por %p83, %p84
      %p87 = scmp.ne.s32.totalorder %s72, %s86
      %p88 = scmp.eq.s32.totalorder %s20, 0
      %p89 = por %p87, %p88
      %s91 = sadd.s32 %s90, 1
      %p94 = scmp.eq.s32.totalorder %s14, 1
      %p95 = scmp.ne.s32.totalorder %s90, %s92
      %p96 = scmp.eq.s32.totalorder %s14, 0
      %p97 = por %p95, %p96
      %p98 = scmp.ne.s32.totalorder %s90, %s92
      %p99 = scmp.eq.s32.totalorder %s19, 1
      %p100 = por %p98, %p99
      %p101 = scmp.ne.s32.totalorder %s92, %s93
      %p102 = scmp.eq.s32.totalorder %s19, 0
      %p103 = por %p101, %p102
      %p104 = scmp.ne.s32.totalorder %s92, %s93
      %p105 = scmp.eq.s32.totalorder %s20, 1
      %p106 = por %p104, %p105
      %p108 = scmp.ne.s32.totalorder %s93, %s107
      %p109 = scmp.eq.s32.totalorder %s20, 0
      %p110 = por %p108, %p109
      %s111 = ssub.s32 %s14, %s21
      %p112 = scmp.eq.s32.totalorder %s111, 0
      %s114 = sadd.s32 %s113, 1
      %s115 = scalar_select %p112, %s113, %s114
      %p118 = pneg %p112
      %p119 = scmp.eq.s32.totalorder %s14, 1
      %p120 = por %p118, %p119
      %p121 = scmp.ne.s32.totalorder %s113, %s116
      %p122 = scmp.eq.s32.totalorder %s14, 0
      %p123 = por %p121, %p122
      %p124 = scmp.ne.s32.totalorder %s113, %s116
      %p125 = scmp.eq.s32.totalorder %s19, 1
      %p126 = por %p124, %p125
      %p127 = scmp.ne.s32.totalorder %s116, %s117
      %p128 = scmp.eq.s32.totalorder %s19, 0
      %p129 = por %p127, %p128
      %p130 = scmp.ne.s32.totalorder %s116, %s117
      %p131 = scmp.eq.s32.totalorder %s20, 1
      %p132 = por %p130, %p131
      %p134 = scmp.ne.s32.totalorder %s117, %s133
      %p135 = scmp.eq.s32.totalorder %s20, 0
      %p136 = por %p134, %p135
      %p137 = scmp.le.s32.totalorder 1, %s14
      %p138 = scmp.lt.s32.totalorder %s14, 3
      %p139 = pnand %p137, %p138
      %p140 = pneg %p139
      // Predicated region
      $region9: #{tpu_custom_call.1} parent=5 // pred_check
        _
      $region10: #{tpu_custom_call.1} parent=5 // pred_check_branch
        %142 = sbr.rel (%p139) target = $region12
      $region11: #{tpu_custom_call.1} parent=5 // pred_region
        %s143 = ssub.s32 %s14, 1
        // Predicated region
        $region13: #{tpu_custom_call.1} parent=11 // pred_check
          %p144 = pneg %p61
        $region14: #{tpu_custom_call.1} parent=11 // pred_check_branch
          %146 = sbr.rel (%p144) target = $region16
        $region15: #{tpu_custom_call.1} parent=11 // pred_region
          _
        $region16: #{tpu_custom_call.1} parent=11 // pred_fallthru
          _
        // Predicated region
        $region17: #{tpu_custom_call.1} parent=11 // pred_check
          %p147 = pneg %p82
        $region18: #{tpu_custom_call.1} parent=11 // pred_check_branch
          %149 = sbr.rel (%p147) target = $region20
        $region19: #{tpu_custom_call.1} parent=11 // pred_region
          _
        $region20: #{tpu_custom_call.1} parent=11 // pred_fallthru
          _
        // Predicated region
        $region21: #{tpu_custom_call.1} parent=11 // pred_check
          %p150 = pneg %p103
        $region22: #{tpu_custom_call.1} parent=11 // pred_check_branch
          %152 = sbr.rel (%p150) target = $region24
        $region23: #{tpu_custom_call.1} parent=11 // pred_region
          %154 = vsyncadd [#allocation5], 0
          %s155 = sshll.u32 %s3, 4
          %s156 = int_to_ptr.hbm [resolvable:$true] %s155
          %s157 = sshll.u32 [#allocation4], 4
          %s158 = int_to_ptr.vmem [resolvable:$true] %s157
          %163 = dma.hbm_to_vmem [thread:$0]  %s156, 16384, %s158, [#allocation5], 512, 512, 32
        $region24: #{tpu_custom_call.1} parent=11 // pred_fallthru
          _
      $region12: #{tpu_custom_call.1} parent=5 // pred_fallthru
        _
      %p164 = scmp.lt.s32.totalorder %s14, 2
      // Predicated region
      $region25: #{tpu_custom_call.1} parent=5 // pred_check
        %p165 = pneg %p164
      $region26: #{tpu_custom_call.1} parent=5 // pred_check_branch
        %167 = sbr.rel (%p165) target = $region28
      $region27: #{tpu_custom_call.1} parent=5 // pred_region
        // Predicated region
        $region29: #{tpu_custom_call.1} parent=27 // pred_check
          %p168 = pneg %p34
        $region30: #{tpu_custom_call.1} parent=27 // pred_check_branch
          %170 = sbr.rel (%p168) target = $region32
        $region31: #{tpu_custom_call.1} parent=27 // pred_region
          %s171 = sand.u32 %s24, 1
          %s172 = scalar_lea.sflag [#allocation3], %s171
          %s173 = sand.u32 %s24, 1
          %s174 = smul.addr %s173, 8
          %s175 = scalar_lea.vmem [#allocation2], %s174
          %177 = vsyncadd %s172, 0
          %s178 = smul.addr %s14, 2
          %s179 = smul.addr %s178, 4
          %s180 = scalar_lea.hbm %s0, %s179
          %s182 = sshll.u32 %s180, 4
          %s183 = int_to_ptr.hbm [resolvable:$true] %s182
          %s184 = sshll.u32 %s175, 4
          %s185 = int_to_ptr.vmem [resolvable:$true] %s184
          %187 = dma.hbm_to_vmem [thread:$0]  %s183, 128, %s185, %s172
        $region32: #{tpu_custom_call.1} parent=27 // pred_fallthru
          _
      $region28: #{tpu_custom_call.1} parent=5 // pred_fallthru
        _
      %p188 = scmp.le.s32.totalorder 1, %s14
      %p189 = scmp.lt.s32.totalorder %s14, 3
      %p190 = pnand %p188, %p189
      %p191 = pneg %p190
      // Predicated region
      $region33: #{tpu_custom_call.1} parent=5 // pred_check
        _
      $region34: #{tpu_custom_call.1} parent=5 // pred_check_branch
        %193 = sbr.rel (%p190) target = $region36
      $region35: #{tpu_custom_call.1} parent=5 // pred_region
        %s194 = ssub.s32 %s14, 1
        %s195 = sand.u32 %s27, 1
        %s196 = scalar_lea.sflag [#allocation3], %s195
        %s197 = sand.u32 %s27, 1
        %s198 = smul.addr %s197, 8
        %s199 = scalar_lea.vmem [#allocation2], %s198
        // Predicated region
        $region37: #{tpu_custom_call.1} parent=35 // pred_check
          %p200 = pneg %p40
        $region38: #{tpu_custom_call.1} parent=35 // pred_check_branch
          %202 = sbr.rel (%p200) target = $region40
        $region39: #{tpu_custom_call.1} parent=35 // pred_region
          %204 = dma.done %s196, 128
        $region40: #{tpu_custom_call.1} parent=35 // pred_fallthru
          _
        // Predicated region
        $region41: #{tpu_custom_call.1} parent=35 // pred_check
          %p205 = pneg %p103
        $region42: #{tpu_custom_call.1} parent=35 // pred_check_branch
          %207 = sbr.rel (%p205) target = $region44
        $region43: #{tpu_custom_call.1} parent=35 // pred_region
          %209 = dma.done [#allocation5], 16384
        $region44: #{tpu_custom_call.1} parent=35 // pred_fallthru
          _
        %s210 = sand.u32 %s27, 1
        %s211 = scalar_lea.sflag [#allocation3], %s210
        %s212 = sand.u32 %s27, 1
        %s213 = smul.addr %s212, 8
        %s214 = scalar_lea.vmem [#allocation2], %s213
        %p215 = pneg %p40
        %p216 = pneg %p37
        %p217 = pneg %p61
        %p218 = pneg %p58
        %p219 = pneg %p82
        %p220 = pneg %p79
        %p221 = pneg %p103
        %p222 = pneg %p100
        %p223 = pneg %p129
        %p224 = pneg %p126
        %p225 = scmp.lt.s32.totalorder %s19, 1
        %s226 = scalar_select %p225, %s19, 1
        %s227 = smul.addr %s226, 8
        %s228 = smul.addr %s227, 4
        %s229 = scalar_lea.vmem %s4, %s228
        %p230 = scmp.lt.s32.totalorder %s19, 1
        %s231 = scalar_select %p230, %s19, 1
        %s232 = smul.addr %s231, 8
        %s233 = smul.addr %s232, 4
        %s234 = scalar_lea.vmem %s4, %s233
        %v235 = vld [vmem:[%s1] sm:$0x7]
        %v236 = vld [vmem:[%s199] sm:$0xff]
        %v237 = vld [vmem:[%s2] sm:$0x7]
        %239 = vset.pattern.permute.xlu0 0
        %240 = vperm.xlu0 %239, %v237
        %v241 = vpop.permute.xlu0 %240
        %244 = vst [vmem:[#allocation1] ss:$2 sm:$0xff] %v236
        %v245 = vld.sshfl [vmem:[#allocation1] sm:$0xff pattern:$0x75316420]
        %v246 = vld.sshfl [vmem:[#allocation1 + $0x8] sm:$0xff pattern:$0x75316420]
        %vm247 = vcmask 31744
        %v249 = vsel %vm247, %v235, 0
        %vm251 = vcmask 1043456
        %v252 = vsel %vm251, %v245, 0
        %v254 = vsel %vm251, %v246, 0
        %256 = vmatpush.msra.mxu0 0.0
        %257 = vmatpush.msra.mxu0 0.0
        %258 = vmatpush.msra.mxu0 0.0
        %259 = vmatpush.msra.mxu0 0.0
        %260 = vmatpush.msra.mxu0 0.0
        %261 = vmatpush.msra.mxu0 0.0
        %262 = vmatpush.msra.mxu0 0.0
        %263 = vmatpush.msra.mxu0 0.0
        %264 = vmatpush.msra.mxu0 0.0
        %265 = vmatpush.msra.mxu0 0.0
        %266 = vmatpush.msra.mxu0 0.0
        %267 = vmatpush.msra.mxu0 0.0
        %268 = vmatpush.msra.mxu0 0.0
        %269 = vmatpush.msra.mxu0 0.0
        %270 = vmatpush.msra.mxu0 0.0
        %271 = vmatpush.msra.mxu0 %v252
        %272 = vmatmul.f32.gmra.mxu0 %v249
        %v273 = vpop.f32.mrf.mxu0
        %v274 = vadd.f32 %v241, %v273
        %275 = vdwg.mxu0
        %276 = vmatpush.msra.mxu0 0.0
        %277 = vmatpush.msra.mxu0 0.0
        %278 = vmatpush.msra.mxu0 0.0
        %279 = vmatpush.msra.mxu0 0.0
        %280 = vmatpush.msra.mxu0 0.0
        %281 = vmatpush.msra.mxu0 0.0
        %282 = vmatpush.msra.mxu0 0.0
        %283 = vmatpush.msra.mxu0 0.0
        %284 = vmatpush.msra.mxu0 0.0
        %285 = vmatpush.msra.mxu0 0.0
        %286 = vmatpush.msra.mxu0 0.0
        %287 = vmatpush.msra.mxu0 0.0
        %288 = vmatpush.msra.mxu0 0.0
        %289 = vmatpush.msra.mxu0 0.0
        %290 = vmatpush.msra.mxu0 0.0
        %291 = vmatpush.msra.mxu0 %v254
        %292 = vmatmul.f32.gmra.mxu0 %v249
        %v293 = vpop.f32.mrf.mxu0
        %v294 = vadd.f32 %v241, %v293
        %295 = vdwg.mxu0
        %v296 = vpack.c.bf16 %v274, %v274
        %v297 = vpack.c.bf16 %v294, %v294
        %v298 = vld [vmem:[#allocation4] sm:$0xff]
        %v299 = vld [vmem:[#allocation4 + $0x8] sm:$0xff]
        %v300 = vld [vmem:[#allocation4 + $0x10] sm:$0xff]
        %v301 = vld [vmem:[#allocation4 + $0x18] sm:$0xff]
        %v302 = vld [vmem:[#allocation4 + $0x20] sm:$0xff]
        %v303 = vld [vmem:[#allocation4 + $0x28] sm:$0xff]
        %v304 = vld [vmem:[#allocation4 + $0x30] sm:$0xff]
        %v305 = vld [vmem:[#allocation4 + $0x38] sm:$0xff]
        %v306 = vld [vmem:[#allocation4 + $0x40] sm:$0xff]
        %v307 = vld [vmem:[#allocation4 + $0x48] sm:$0xff]
        %v308 = vld [vmem:[#allocation4 + $0x50] sm:$0xff]
        %v309 = vld [vmem:[#allocation4 + $0x58] sm:$0xff]
        %v310 = vld [vmem:[#allocation4 + $0x60] sm:$0xff]
        %v311 = vld [vmem:[#allocation4 + $0x68] sm:$0xff]
        %v312 = vld [vmem:[#allocation4 + $0x70] sm:$0xff]
        %v313 = vld [vmem:[#allocation4 + $0x78] sm:$0xff]
        %v314 = vld [vmem:[#allocation4 + $0x80] sm:$0xff]
        %v315 = vld [vmem:[#allocation4 + $0x88] sm:$0xff]
        %v316 = vld [vmem:[#allocation4 + $0x90] sm:$0xff]
        %v317 = vld [vmem:[#allocation4 + $0x98] sm:$0xff]
        %v318 = vld [vmem:[#allocation4 + $0xa0] sm:$0xff]
        %v319 = vld [vmem:[#allocation4 + $0xa8] sm:$0xff]
        %v320 = vld [vmem:[#allocation4 + $0xb0] sm:$0xff]
        %v321 = vld [vmem:[#allocation4 + $0xb8] sm:$0xff]
        %v322 = vld [vmem:[#allocation4 + $0xc0] sm:$0xff]
        %v323 = vld [vmem:[#allocation4 + $0xc8] sm:$0xff]
        %v324 = vld [vmem:[#allocation4 + $0xd0] sm:$0xff]
        %v325 = vld [vmem:[#allocation4 + $0xd8] sm:$0xff]
        %v326 = vld [vmem:[#allocation4 + $0xe0] sm:$0xff]
        %v327 = vld [vmem:[#allocation4 + $0xe8] sm:$0xff]
        %v328 = vld [vmem:[#allocation4 + $0xf0] sm:$0xff]
        %v329 = vld [vmem:[#allocation4 + $0xf8] sm:$0xff]
        %v330 = vld [vmem:[#allocation4 + $0x100] sm:$0xff]
        %v331 = vld [vmem:[#allocation4 + $0x108] sm:$0xff]
        %v332 = vld [vmem:[#allocation4 + $0x110] sm:$0xff]
        %v333 = vld [vmem:[#allocation4 + $0x118] sm:$0xff]
        %v334 = vld [vmem:[#allocation4 + $0x120] sm:$0xff]
        %v335 = vld [vmem:[#allocation4 + $0x128] sm:$0xff]
        %v336 = vld [vmem:[#allocation4 + $0x130] sm:$0xff]
        %v337 = vld [vmem:[#allocation4 + $0x138] sm:$0xff]
        %v338 = vld [vmem:[#allocation4 + $0x140] sm:$0xff]
        %v339 = vld [vmem:[#allocation4 + $0x148] sm:$0xff]
        %v340 = vld [vmem:[#allocation4 + $0x150] sm:$0xff]
        %v341 = vld [vmem:[#allocation4 + $0x158] sm:$0xff]
        %v342 = vld [vmem:[#allocation4 + $0x160] sm:$0xff]
        %v343 = vld [vmem:[#allocation4 + $0x168] sm:$0xff]
        %v344 = vld [vmem:[#allocation4 + $0x170] sm:$0xff]
        %v345 = vld [vmem:[#allocation4 + $0x178] sm:$0xff]
        %v346 = vld [vmem:[#allocation4 + $0x180] sm:$0xff]
        %v347 = vld [vmem:[#allocation4 + $0x188] sm:$0xff]
        %v348 = vld [vmem:[#allocation4 + $0x190] sm:$0xff]
        %v349 = vld [vmem:[#allocation4 + $0x198] sm:$0xff]
        %v350 = vld [vmem:[#allocation4 + $0x1a0] sm:$0xff]
        %v351 = vld [vmem:[#allocation4 + $0x1a8] sm:$0xff]
        %v352 = vld [vmem:[#allocation4 + $0x1b0] sm:$0xff]
        %v353 = vld [vmem:[#allocation4 + $0x1b8] sm:$0xff]
        %v354 = vld [vmem:[#allocation4 + $0x1c0] sm:$0xff]
        %v355 = vld [vmem:[#allocation4 + $0x1c8] sm:$0xff]
        %v356 = vld [vmem:[#allocation4 + $0x1d0] sm:$0xff]
        %v357 = vld [vmem:[#allocation4 + $0x1d8] sm:$0xff]
        %v358 = vld [vmem:[#allocation4 + $0x1e0] sm:$0xff]
        %v359 = vld [vmem:[#allocation4 + $0x1e8] sm:$0xff]
        %v360 = vld [vmem:[#allocation4 + $0x1f0] sm:$0xff]
        %v361 = vld [vmem:[#allocation4 + $0x1f8] sm:$0xff]
        %v362 = vld [vmem:[#allocation4 + $0x200] sm:$0xff]
        %v363 = vld [vmem:[#allocation4 + $0x208] sm:$0xff]
        %v364 = vld [vmem:[#allocation4 + $0x210] sm:$0xff]
        %v365 = vld [vmem:[#allocation4 + $0x218] sm:$0xff]
        %v366 = vld [vmem:[#allocation4 + $0x220] sm:$0xff]
        %v367 = vld [vmem:[#allocation4 + $0x228] sm:$0xff]
        %v368 = vld [vmem:[#allocation4 + $0x230] sm:$0xff]
        %v369 = vld [vmem:[#allocation4 + $0x238] sm:$0xff]
        %v370 = vld [vmem:[#allocation4 + $0x240] sm:$0xff]
        %v371 = vld [vmem:[#allocation4 + $0x248] sm:$0xff]
        %v372 = vld [vmem:[#allocation4 + $0x250] sm:$0xff]
        %v373 = vld [vmem:[#allocation4 + $0x258] sm:$0xff]
        %v374 = vld [vmem:[#allocation4 + $0x260] sm:$0xff]
        %v375 = vld [vmem:[#allocation4 + $0x268] sm:$0xff]
        %v376 = vld [vmem:[#allocation4 + $0x270] sm:$0xff]
        %v377 = vld [vmem:[#allocation4 + $0x278] sm:$0xff]
        %v378 = vld [vmem:[#allocation4 + $0x280] sm:$0xff]
        %v379 = vld [vmem:[#allocation4 + $0x288] sm:$0xff]
        %v380 = vld [vmem:[#allocation4 + $0x290] sm:$0xff]
        %v381 = vld [vmem:[#allocation4 + $0x298] sm:$0xff]
        %v382 = vld [vmem:[#allocation4 + $0x2a0] sm:$0xff]
        %v383 = vld [vmem:[#allocation4 + $0x2a8] sm:$0xff]
        %v384 = vld [vmem:[#allocation4 + $0x2b0] sm:$0xff]
        %v385 = vld [vmem:[#allocation4 + $0x2b8] sm:$0xff]
        %v386 = vld [vmem:[#allocation4 + $0x2c0] sm:$0xff]
        %v387 = vld [vmem:[#allocation4 + $0x2c8] sm:$0xff]
        %v388 = vld [vmem:[#allocation4 + $0x2d0] sm:$0xff]
        %v389 = vld [vmem:[#allocation4 + $0x2d8] sm:$0xff]
        %v390 = vld [vmem:[#allocation4 + $0x2e0] sm:$0xff]
        %v391 = vld [vmem:[#allocation4 + $0x2e8] sm:$0xff]
        %v392 = vld [vmem:[#allocation4 + $0x2f0] sm:$0xff]
        %v393 = vld [vmem:[#allocation4 + $0x2f8] sm:$0xff]
        %v394 = vld [vmem:[#allocation4 + $0x300] sm:$0xff]
        %v395 = vld [vmem:[#allocation4 + $0x308] sm:$0xff]
        %v396 = vld [vmem:[#allocation4 + $0x310] sm:$0xff]
        %v397 = vld [vmem:[#allocation4 + $0x318] sm:$0xff]
        %v398 = vld [vmem:[#allocation4 + $0x320] sm:$0xff]
        %v399 = vld [vmem:[#allocation4 + $0x328] sm:$0xff]
        %v400 = vld [vmem:[#allocation4 + $0x330] sm:$0xff]
        %v401 = vld [vmem:[#allocation4 + $0x338] sm:$0xff]
        %v402 = vld [vmem:[#allocation4 + $0x340] sm:$0xff]
        %v403 = vld [vmem:[#allocation4 + $0x348] sm:$0xff]
        %v404 = vld [vmem:[#allocation4 + $0x350] sm:$0xff]
        %v405 = vld [vmem:[#allocation4 + $0x358] sm:$0xff]
        %v406 = vld [vmem:[#allocation4 + $0x360] sm:$0xff]
        %v407 = vld [vmem:[#allocation4 + $0x368] sm:$0xff]
        %v408 = vld [vmem:[#allocation4 + $0x370] sm:$0xff]
        %v409 = vld [vmem:[#allocation4 + $0x378] sm:$0xff]
        %v410 = vld [vmem:[#allocation4 + $0x380] sm:$0xff]
        %v411 = vld [vmem:[#allocation4 + $0x388] sm:$0xff]
        %v412 = vld [vmem:[#allocation4 + $0x390] sm:$0xff]
        %v413 = vld [vmem:[#allocation4 + $0x398] sm:$0xff]
        %v414 = vld [vmem:[#allocation4 + $0x3a0] sm:$0xff]
        %v415 = vld [vmem:[#allocation4 + $0x3a8] sm:$0xff]
        %v416 = vld [vmem:[#allocation4 + $0x3b0] sm:$0xff]
        %v417 = vld [vmem:[#allocation4 + $0x3b8] sm:$0xff]
        %v418 = vld [vmem:[#allocation4 + $0x3c0] sm:$0xff]
        %v419 = vld [vmem:[#allocation4 + $0x3c8] sm:$0xff]
        %v420 = vld [vmem:[#allocation4 + $0x3d0] sm:$0xff]
        %v421 = vld [vmem:[#allocation4 + $0x3d8] sm:$0xff]
        %v422 = vld [vmem:[#allocation4 + $0x3e0] sm:$0xff]
        %v423 = vld [vmem:[#allocation4 + $0x3e8] sm:$0xff]
        %v424 = vld [vmem:[#allocation4 + $0x3f0] sm:$0xff]
        %v425 = vld [vmem:[#allocation4 + $0x3f8] sm:$0xff]
        %v554 = vunpack.c.l.b16 %v298
        %v555 = vunpack.c.h.b16 %v298
        %v556 = vunpack.c.l.b16 %v299
        %v557 = vunpack.c.h.b16 %v299
        %v558 = vunpack.c.l.b16 %v300
        %v559 = vunpack.c.h.b16 %v300
        %v560 = vunpack.c.l.b16 %v301
        %v561 = vunpack.c.h.b16 %v301
        %v562 = vunpack.c.l.b16 %v302
        %v563 = vunpack.c.h.b16 %v302
        %v564 = vunpack.c.l.b16 %v303
        %v565 = vunpack.c.h.b16 %v303
        %v566 = vunpack.c.l.b16 %v304
        %v567 = vunpack.c.h.b16 %v304
        %v568 = vunpack.c.l.b16 %v305
        %v569 = vunpack.c.h.b16 %v305
        %v570 = vunpack.c.l.b16 %v306
        %v571 = vunpack.c.h.b16 %v306
        %v572 = vunpack.c.l.b16 %v307
        %v573 = vunpack.c.h.b16 %v307
        %v574 = vunpack.c.l.b16 %v308
        %v575 = vunpack.c.h.b16 %v308
        %v576 = vunpack.c.l.b16 %v309
        %v577 = vunpack.c.h.b16 %v309
        %v578 = vunpack.c.l.b16 %v310
        %v579 = vunpack.c.h.b16 %v310
        %v580 = vunpack.c.l.b16 %v311
        %v581 = vunpack.c.h.b16 %v311
        %v582 = vunpack.c.l.b16 %v312
        %v583 = vunpack.c.h.b16 %v312
        %v584 = vunpack.c.l.b16 %v313
        %v585 = vunpack.c.h.b16 %v313
        %v586 = vunpack.c.l.b16 %v314
        %v587 = vunpack.c.h.b16 %v314
        %v588 = vunpack.c.l.b16 %v315
        %v589 = vunpack.c.h.b16 %v315
        %v590 = vunpack.c.l.b16 %v316
        %v591 = vunpack.c.h.b16 %v316
        %v592 = vunpack.c.l.b16 %v317
        %v593 = vunpack.c.h.b16 %v317
        %v594 = vunpack.c.l.b16 %v318
        %v595 = vunpack.c.h.b16 %v318
        %v596 = vunpack.c.l.b16 %v319
        %v597 = vunpack.c.h.b16 %v319
        %v598 = vunpack.c.l.b16 %v320
        %v599 = vunpack.c.h.b16 %v320
        %v600 = vunpack.c.l.b16 %v321
        %v601 = vunpack.c.h.b16 %v321
        %v602 = vunpack.c.l.b16 %v322
        %v603 = vunpack.c.h.b16 %v322
        %v604 = vunpack.c.l.b16 %v323
        %v605 = vunpack.c.h.b16 %v323
        %v606 = vunpack.c.l.b16 %v324
        %v607 = vunpack.c.h.b16 %v324
        %v608 = vunpack.c.l.b16 %v325
        %v609 = vunpack.c.h.b16 %v325
        %v610 = vunpack.c.l.b16 %v326
        %v611 = vunpack.c.h.b16 %v326
        %v612 = vunpack.c.l.b16 %v327
        %v613 = vunpack.c.h.b16 %v327
        %v614 = vunpack.c.l.b16 %v328
        %v615 = vunpack.c.h.b16 %v328
        %v616 = vunpack.c.l.b16 %v329
        %v617 = vunpack.c.h.b16 %v329
        %v618 = vunpack.c.l.b16 %v330
        %v619 = vunpack.c.h.b16 %v330
        %v620 = vunpack.c.l.b16 %v331
        %v621 = vunpack.c.h.b16 %v331
        %v622 = vunpack.c.l.b16 %v332
        %v623 = vunpack.c.h.b16 %v332
        %v624 = vunpack.c.l.b16 %v333
        %v625 = vunpack.c.h.b16 %v333
        %v626 = vunpack.c.l.b16 %v334
        %v627 = vunpack.c.h.b16 %v334
        %v628 = vunpack.c.l.b16 %v335
        %v629 = vunpack.c.h.b16 %v335
        %v630 = vunpack.c.l.b16 %v336
        %v631 = vunpack.c.h.b16 %v336
        %v632 = vunpack.c.l.b16 %v337
        %v633 = vunpack.c.h.b16 %v337
        %v634 = vunpack.c.l.b16 %v338
        %v635 = vunpack.c.h.b16 %v338
        %v636 = vunpack.c.l.b16 %v339
        %v637 = vunpack.c.h.b16 %v339
        %v638 = vunpack.c.l.b16 %v340
        %v639 = vunpack.c.h.b16 %v340
        %v640 = vunpack.c.l.b16 %v341
        %v641 = vunpack.c.h.b16 %v341
        %v642 = vunpack.c.l.b16 %v342
        %v643 = vunpack.c.h.b16 %v342
        %v644 = vunpack.c.l.b16 %v343
        %v645 = vunpack.c.h.b16 %v343
        %v646 = vunpack.c.l.b16 %v344
        %v647 = vunpack.c.h.b16 %v344
        %v648 = vunpack.c.l.b16 %v345
        %v649 = vunpack.c.h.b16 %v345
        %v650 = vunpack.c.l.b16 %v346
        %v651 = vunpack.c.h.b16 %v346
        %v652 = vunpack.c.l.b16 %v347
        %v653 = vunpack.c.h.b16 %v347
        %v654 = vunpack.c.l.b16 %v348
        %v655 = vunpack.c.h.b16 %v348
        %v656 = vunpack.c.l.b16 %v349
        %v657 = vunpack.c.h.b16 %v349
        %v658 = vunpack.c.l.b16 %v350
        %v659 = vunpack.c.h.b16 %v350
        %v660 = vunpack.c.l.b16 %v351
        %v661 = vunpack.c.h.b16 %v351
        %v662 = vunpack.c.l.b16 %v352
        %v663 = vunpack.c.h.b16 %v352
        %v664 = vunpack.c.l.b16 %v353
        %v665 = vunpack.c.h.b16 %v353
        %v666 = vunpack.c.l.b16 %v354
        %v667 = vunpack.c.h.b16 %v354
        %v668 = vunpack.c.l.b16 %v355
        %v669 = vunpack.c.h.b16 %v355
        %v670 = vunpack.c.l.b16 %v356
        %v671 = vunpack.c.h.b16 %v356
        %v672 = vunpack.c.l.b16 %v357
        %v673 = vunpack.c.h.b16 %v357
        %v674 = vunpack.c.l.b16 %v358
        %v675 = vunpack.c.h.b16 %v358
        %v676 = vunpack.c.l.b16 %v359
        %v677 = vunpack.c.h.b16 %v359
        %v678 = vunpack.c.l.b16 %v360
        %v679 = vunpack.c.h.b16 %v360
        %v680 = vunpack.c.l.b16 %v361
        %v681 = vunpack.c.h.b16 %v361
        %v682 = vunpack.c.l.b16 %v362
        %v683 = vunpack.c.h.b16 %v362
        %v684 = vunpack.c.l.b16 %v363
        %v685 = vunpack.c.h.b16 %v363
        %v686 = vunpack.c.l.b16 %v364
        %v687 = vunpack.c.h.b16 %v364
        %v688 = vunpack.c.l.b16 %v365
        %v689 = vunpack.c.h.b16 %v365
        %v690 = vunpack.c.l.b16 %v366
        %v691 = vunpack.c.h.b16 %v366
        %v692 = vunpack.c.l.b16 %v367
        %v693 = vunpack.c.h.b16 %v367
        %v694 = vunpack.c.l.b16 %v368
        %v695 = vunpack.c.h.b16 %v368
        %v696 = vunpack.c.l.b16 %v369
        %v697 = vunpack.c.h.b16 %v369
        %v698 = vunpack.c.l.b16 %v370
        %v699 = vunpack.c.h.b16 %v370
        %v700 = vunpack.c.l.b16 %v371
        %v701 = vunpack.c.h.b16 %v371
        %v702 = vunpack.c.l.b16 %v372
        %v703 = vunpack.c.h.b16 %v372
        %v704 = vunpack.c.l.b16 %v373
        %v705 = vunpack.c.h.b16 %v373
        %v706 = vunpack.c.l.b16 %v374
        %v707 = vunpack.c.h.b16 %v374
        %v708 = vunpack.c.l.b16 %v375
        %v709 = vunpack.c.h.b16 %v375
        %v710 = vunpack.c.l.b16 %v376
        %v711 = vunpack.c.h.b16 %v376
        %v712 = vunpack.c.l.b16 %v377
        %v713 = vunpack.c.h.b16 %v377
        %v714 = vunpack.c.l.b16 %v378
        %v715 = vunpack.c.h.b16 %v378
        %v716 = vunpack.c.l.b16 %v379
        %v717 = vunpack.c.h.b16 %v379
        %v718 = vunpack.c.l.b16 %v380
        %v719 = vunpack.c.h.b16 %v380
        %v720 = vunpack.c.l.b16 %v381
        %v721 = vunpack.c.h.b16 %v381
        %v722 = vunpack.c.l.b16 %v382
        %v723 = vunpack.c.h.b16 %v382
        %v724 = vunpack.c.l.b16 %v383
        %v725 = vunpack.c.h.b16 %v383
        %v726 = vunpack.c.l.b16 %v384
        %v727 = vunpack.c.h.b16 %v384
        %v728 = vunpack.c.l.b16 %v385
        %v729 = vunpack.c.h.b16 %v385
        %v730 = vunpack.c.l.b16 %v386
        %v731 = vunpack.c.h.b16 %v386
        %v732 = vunpack.c.l.b16 %v387
        %v733 = vunpack.c.h.b16 %v387
        %v734 = vunpack.c.l.b16 %v388
        %v735 = vunpack.c.h.b16 %v388
        %v736 = vunpack.c.l.b16 %v389
        %v737 = vunpack.c.h.b16 %v389
        %v738 = vunpack.c.l.b16 %v390
        %v739 = vunpack.c.h.b16 %v390
        %v740 = vunpack.c.l.b16 %v391
        %v741 = vunpack.c.h.b16 %v391
        %v742 = vunpack.c.l.b16 %v392
        %v743 = vunpack.c.h.b16 %v392
        %v744 = vunpack.c.l.b16 %v393
        %v745 = vunpack.c.h.b16 %v393
        %v746 = vunpack.c.l.b16 %v394
        %v747 = vunpack.c.h.b16 %v394
        %v748 = vunpack.c.l.b16 %v395
        %v749 = vunpack.c.h.b16 %v395
        %v750 = vunpack.c.l.b16 %v396
        %v751 = vunpack.c.h.b16 %v396
        %v752 = vunpack.c.l.b16 %v397
        %v753 = vunpack.c.h.b16 %v397
        %v754 = vunpack.c.l.b16 %v398
        %v755 = vunpack.c.h.b16 %v398
        %v756 = vunpack.c.l.b16 %v399
        %v757 = vunpack.c.h.b16 %v399
        %v758 = vunpack.c.l.b16 %v400
        %v759 = vunpack.c.h.b16 %v400
        %v760 = vunpack.c.l.b16 %v401
        %v761 = vunpack.c.h.b16 %v401
        %v762 = vunpack.c.l.b16 %v402
        %v763 = vunpack.c.h.b16 %v402
        %v764 = vunpack.c.l.b16 %v403
        %v765 = vunpack.c.h.b16 %v403
        %v766 = vunpack.c.l.b16 %v404
        %v767 = vunpack.c.h.b16 %v404
        %v768 = vunpack.c.l.b16 %v405
        %v769 = vunpack.c.h.b16 %v405
        %v770 = vunpack.c.l.b16 %v406
        %v771 = vunpack.c.h.b16 %v406
        %v772 = vunpack.c.l.b16 %v407
        %v773 = vunpack.c.h.b16 %v407
        %v774 = vunpack.c.l.b16 %v408
        %v775 = vunpack.c.h.b16 %v408
        %v776 = vunpack.c.l.b16 %v409
        %v777 = vunpack.c.h.b16 %v409
        %v778 = vunpack.c.l.b16 %v410
        %v779 = vunpack.c.h.b16 %v410
        %v780 = vunpack.c.l.b16 %v411
        %v781 = vunpack.c.h.b16 %v411
        %v782 = vunpack.c.l.b16 %v412
        %v783 = vunpack.c.h.b16 %v412
        %v784 = vunpack.c.l.b16 %v413
        %v785 = vunpack.c.h.b16 %v413
        %v786 = vunpack.c.l.b16 %v414
        %v787 = vunpack.c.h.b16 %v414
        %v788 = vunpack.c.l.b16 %v415
        %v789 = vunpack.c.h.b16 %v415
        %v790 = vunpack.c.l.b16 %v416
        %v791 = vunpack.c.h.b16 %v416
        %v792 = vunpack.c.l.b16 %v417
        %v793 = vunpack.c.h.b16 %v417
        %v794 = vunpack.c.l.b16 %v418
        %v795 = vunpack.c.h.b16 %v418
        %v796 = vunpack.c.l.b16 %v419
        %v797 = vunpack.c.h.b16 %v419
        %v798 = vunpack.c.l.b16 %v420
        %v799 = vunpack.c.h.b16 %v420
        %v800 = vunpack.c.l.b16 %v421
        %v801 = vunpack.c.h.b16 %v421
        %v802 = vunpack.c.l.b16 %v422
        %v803 = vunpack.c.h.b16 %v422
        %v804 = vunpack.c.l.b16 %v423
        %v805 = vunpack.c.h.b16 %v423
        %v806 = vunpack.c.l.b16 %v424
        %v807 = vunpack.c.h.b16 %v424
        %v808 = vunpack.c.l.b16 %v425
        %v809 = vunpack.c.h.b16 %v425
        %v810 = vpack.c.b16 %v562, %v554
        %v811 = vpack.c.b16 %v563, %v555
        %v812 = vpack.c.b16 %v564, %v556
        %v813 = vpack.c.b16 %v565, %v557
        %v814 = vpack.c.b16 %v566, %v558
        %v815 = vpack.c.b16 %v567, %v559
        %v816 = vpack.c.b16 %v568, %v560
        %v817 = vpack.c.b16 %v569, %v561
        %v818 = vpack.c.b16 %v578, %v570
        %v819 = vpack.c.b16 %v579, %v571
        %v820 = vpack.c.b16 %v580, %v572
        %v821 = vpack.c.b16 %v581, %v573
        %v822 = vpack.c.b16 %v582, %v574
        %v823 = vpack.c.b16 %v583, %v575
        %v824 = vpack.c.b16 %v584, %v576
        %v825 = vpack.c.b16 %v585, %v577
        %v826 = vpack.c.b16 %v594, %v586
        %v827 = vpack.c.b16 %v595, %v587
        %v828 = vpack.c.b16 %v596, %v588
        %v829 = vpack.c.b16 %v597, %v589
        %v830 = vpack.c.b16 %v598, %v590
        %v831 = vpack.c.b16 %v599, %v591
        %v832 = vpack.c.b16 %v600, %v592
        %v833 = vpack.c.b16 %v601, %v593
        %v834 = vpack.c.b16 %v610, %v602
        %v835 = vpack.c.b16 %v611, %v603
        %v836 = vpack.c.b16 %v612, %v604
        %v837 = vpack.c.b16 %v613, %v605
        %v838 = vpack.c.b16 %v614, %v606
        %v839 = vpack.c.b16 %v615, %v607
        %v840 = vpack.c.b16 %v616, %v608
        %v841 = vpack.c.b16 %v617, %v609
        %v842 = vpack.c.b16 %v626, %v618
        %v843 = vpack.c.b16 %v627, %v619
        %v844 = vpack.c.b16 %v628, %v620
        %v845 = vpack.c.b16 %v629, %v621
        %v846 = vpack.c.b16 %v630, %v622
        %v847 = vpack.c.b16 %v631, %v623
        %v848 = vpack.c.b16 %v632, %v624
        %v849 = vpack.c.b16 %v633, %v625
        %v850 = vpack.c.b16 %v642, %v634
        %v851 = vpack.c.b16 %v643, %v635
        %v852 = vpack.c.b16 %v644, %v636
        %v853 = vpack.c.b16 %v645, %v637
        %v854 = vpack.c.b16 %v646, %v638
        %v855 = vpack.c.b16 %v647, %v639
        %v856 = vpack.c.b16 %v648, %v640
        %v857 = vpack.c.b16 %v649, %v641
        %v858 = vpack.c.b16 %v658, %v650
        %v859 = vpack.c.b16 %v659, %v651
        %v860 = vpack.c.b16 %v660, %v652
        %v861 = vpack.c.b16 %v661, %v653
        %v862 = vpack.c.b16 %v662, %v654
        %v863 = vpack.c.b16 %v663, %v655
        %v864 = vpack.c.b16 %v664, %v656
        %v865 = vpack.c.b16 %v665, %v657
        %v866 = vpack.c.b16 %v674, %v666
        %v867 = vpack.c.b16 %v675, %v667
        %v868 = vpack.c.b16 %v676, %v668
        %v869 = vpack.c.b16 %v677, %v669
        %v870 = vpack.c.b16 %v678, %v670
        %v871 = vpack.c.b16 %v679, %v671
        %v872 = vpack.c.b16 %v680, %v672
        %v873 = vpack.c.b16 %v681, %v673
        %v874 = vpack.c.b16 %v690, %v682
        %v875 = vpack.c.b16 %v691, %v683
        %v876 = vpack.c.b16 %v692, %v684
        %v877 = vpack.c.b16 %v693, %v685
        %v878 = vpack.c.b16 %v694, %v686
        %v879 = vpack.c.b16 %v695, %v687
        %v880 = vpack.c.b16 %v696, %v688
        %v881 = vpack.c.b16 %v697, %v689
        %v882 = vpack.c.b16 %v706, %v698
        %v883 = vpack.c.b16 %v707, %v699
        %v884 = vpack.c.b16 %v708, %v700
        %v885 = vpack.c.b16 %v709, %v701
        %v886 = vpack.c.b16 %v710, %v702
        %v887 = vpack.c.b16 %v711, %v703
        %v888 = vpack.c.b16 %v712, %v704
        %v889 = vpack.c.b16 %v713, %v705
        %v890 = vpack.c.b16 %v722, %v714
        %v891 = vpack.c.b16 %v723, %v715
        %v892 = vpack.c.b16 %v724, %v716
        %v893 = vpack.c.b16 %v725, %v717
        %v894 = vpack.c.b16 %v726, %v718
        %v895 = vpack.c.b16 %v727, %v719
        %v896 = vpack.c.b16 %v728, %v720
        %v897 = vpack.c.b16 %v729, %v721
        %v898 = vpack.c.b16 %v738, %v730
        %v899 = vpack.c.b16 %v739, %v731
        %v900 = vpack.c.b16 %v740, %v732
        %v901 = vpack.c.b16 %v741, %v733
        %v902 = vpack.c.b16 %v742, %v734
        %v903 = vpack.c.b16 %v743, %v735
        %v904 = vpack.c.b16 %v744, %v736
        %v905 = vpack.c.b16 %v745, %v737
        %v906 = vpack.c.b16 %v754, %v746
        %v907 = vpack.c.b16 %v755, %v747
        %v908 = vpack.c.b16 %v756, %v748
        %v909 = vpack.c.b16 %v757, %v749
        %v910 = vpack.c.b16 %v758, %v750
        %v911 = vpack.c.b16 %v759, %v751
        %v912 = vpack.c.b16 %v760, %v752
        %v913 = vpack.c.b16 %v761, %v753
        %v914 = vpack.c.b16 %v770, %v762
        %v915 = vpack.c.b16 %v771, %v763
        %v916 = vpack.c.b16 %v772, %v764
        %v917 = vpack.c.b16 %v773, %v765
        %v918 = vpack.c.b16 %v774, %v766
        %v919 = vpack.c.b16 %v775, %v767
        %v920 = vpack.c.b16 %v776, %v768
        %v921 = vpack.c.b16 %v777, %v769
        %v922 = vpack.c.b16 %v786, %v778
        %v923 = vpack.c.b16 %v787, %v779
        %v924 = vpack.c.b16 %v788, %v780
        %v925 = vpack.c.b16 %v789, %v781
        %v926 = vpack.c.b16 %v790, %v782
        %v927 = vpack.c.b16 %v791, %v783
        %v928 = vpack.c.b16 %v792, %v784
        %v929 = vpack.c.b16 %v793, %v785
        %v930 = vpack.c.b16 %v802, %v794
        %v931 = vpack.c.b16 %v803, %v795
        %v932 = vpack.c.b16 %v804, %v796
        %v933 = vpack.c.b16 %v805, %v797
        %v934 = vpack.c.b16 %v806, %v798
        %v935 = vpack.c.b16 %v807, %v799
        %v936 = vpack.c.b16 %v808, %v800
        %v937 = vpack.c.b16 %v809, %v801
        %1066 = vmatpush.bf16.msra.mxu0 %v866
        %1067 = vmatpush.bf16.msra.mxu0 %v858
        %1068 = vmatpush.bf16.msra.mxu0 %v850
        %1069 = vmatpush.bf16.msra.mxu0 %v842
        %1070 = vmatpush.bf16.msra.mxu0 %v834
        %1071 = vmatpush.bf16.msra.mxu0 %v826
        %1072 = vmatpush.bf16.msra.mxu0 %v818
        %1073 = vmatpush.bf16.msra.mxu0 %v810
        %1074 = vmatmul.bf16.gmra.mxu0 %v296
        %v1075 = vpop.f32.mrf.mxu0
        %v1076 = vadd.f32 0.0, %v1075
        %v1077 = vpop.f32.mrf.mxu0
        %1078 = vdwg.mxu0
        %1079 = vmatpush.bf16.msra.mxu0 %v930
        %1080 = vmatpush.bf16.msra.mxu0 %v922
        %1081 = vmatpush.bf16.msra.mxu0 %v914
        %1082 = vmatpush.bf16.msra.mxu0 %v906
        %1083 = vmatpush.bf16.msra.mxu0 %v898
        %1084 = vmatpush.bf16.msra.mxu0 %v890
        %1085 = vmatpush.bf16.msra.mxu0 %v882
        %1086 = vmatpush.bf16.msra.mxu0 %v874
        %1087 = vmatmul.bf16.gmra.mxu0 %v297
        %v1088 = vpop.f32.mrf.mxu0
        %v1089 = vadd.f32 %v1076, %v1088
        %v1090 = vpop.f32.mrf.mxu0
        %1091 = vdwg.mxu0
        %1092 = vmatpush.bf16.msra.mxu0 %v867
        %1093 = vmatpush.bf16.msra.mxu0 %v859
        %1094 = vmatpush.bf16.msra.mxu0 %v851
        %1095 = vmatpush.bf16.msra.mxu0 %v843
        %1096 = vmatpush.bf16.msra.mxu0 %v835
        %1097 = vmatpush.bf16.msra.mxu0 %v827
        %1098 = vmatpush.bf16.msra.mxu0 %v819
        %1099 = vmatpush.bf16.msra.mxu0 %v811
        %1100 = vmatmul.bf16.gmra.mxu0 %v296
        %v1101 = vpop.f32.mrf.mxu0
        %v1102 = vadd.f32 0.0, %v1101
        %v1103 = vpop.f32.mrf.mxu0
        %1104 = vdwg.mxu0
        %1105 = vmatpush.bf16.msra.mxu0 %v931
        %1106 = vmatpush.bf16.msra.mxu0 %v923
        %1107 = vmatpush.bf16.msra.mxu0 %v915
        %1108 = vmatpush.bf16.msra.mxu0 %v907
        %1109 = vmatpush.bf16.msra.mxu0 %v899
        %1110 = vmatpush.bf16.msra.mxu0 %v891
        %1111 = vmatpush.bf16.msra.mxu0 %v883
        %1112 = vmatpush.bf16.msra.mxu0 %v875
        %1113 = vmatmul.bf16.gmra.mxu0 %v297
        %v1114 = vpop.f32.mrf.mxu0
        %v1115 = vadd.f32 %v1102, %v1114
        %v1116 = vpop.f32.mrf.mxu0
        %1117 = vdwg.mxu0
        %1118 = vmatpush.bf16.msra.mxu0 %v868
        %1119 = vmatpush.bf16.msra.mxu0 %v860
        %1120 = vmatpush.bf16.msra.mxu0 %v852
        %1121 = vmatpush.bf16.msra.mxu0 %v844
        %1122 = vmatpush.bf16.msra.mxu0 %v836
        %1123 = vmatpush.bf16.msra.mxu0 %v828
        %1124 = vmatpush.bf16.msra.mxu0 %v820
        %1125 = vmatpush.bf16.msra.mxu0 %v812
        %1126 = vmatmul.bf16.gmra.mxu0 %v296
        %v1127 = vpop.f32.mrf.mxu0
        %v1128 = vadd.f32 0.0, %v1127
        %v1129 = vpop.f32.mrf.mxu0
        %1130 = vdwg.mxu0
        %1131 = vmatpush.bf16.msra.mxu0 %v932
        %1132 = vmatpush.bf16.msra.mxu0 %v924
        %1133 = vmatpush.bf16.msra.mxu0 %v916
        %1134 = vmatpush.bf16.msra.mxu0 %v908
        %1135 = vmatpush.bf16.msra.mxu0 %v900
        %1136 = vmatpush.bf16.msra.mxu0 %v892
        %1137 = vmatpush.bf16.msra.mxu0 %v884
        %1138 = vmatpush.bf16.msra.mxu0 %v876
        %1139 = vmatmul.bf16.gmra.mxu0 %v297
        %v1140 = vpop.f32.mrf.mxu0
        %v1141 = vadd.f32 %v1128, %v1140
        %v1142 = vpop.f32.mrf.mxu0
        %1143 = vdwg.mxu0
        %1144 = vmatpush.bf16.msra.mxu0 %v869
        %1145 = vmatpush.bf16.msra.mxu0 %v861
        %1146 = vmatpush.bf16.msra.mxu0 %v853
        %1147 = vmatpush.bf16.msra.mxu0 %v845
        %1148 = vmatpush.bf16.msra.mxu0 %v837
        %1149 = vmatpush.bf16.msra.mxu0 %v829
        %1150 = vmatpush.bf16.msra.mxu0 %v821
        %1151 = vmatpush.bf16.msra.mxu0 %v813
        %1152 = vmatmul.bf16.gmra.mxu0 %v296
        %v1153 = vpop.f32.mrf.mxu0
        %v1154 = vadd.f32 0.0, %v1153
        %v1155 = vpop.f32.mrf.mxu0
        %1156 = vdwg.mxu0
        %1157 = vmatpush.bf16.msra.mxu0 %v933
        %1158 = vmatpush.bf16.msra.mxu0 %v925
        %1159 = vmatpush.bf16.msra.mxu0 %v917
        %1160 = vmatpush.bf16.msra.mxu0 %v909
        %1161 = vmatpush.bf16.msra.mxu0 %v901
        %1162 = vmatpush.bf16.msra.mxu0 %v893
        %1163 = vmatpush.bf16.msra.mxu0 %v885
        %1164 = vmatpush.bf16.msra.mxu0 %v877
        %1165 = vmatmul.bf16.gmra.mxu0 %v297
        %v1166 = vpop.f32.mrf.mxu0
        %v1167 = vadd.f32 %v1154, %v1166
        %v1168 = vpop.f32.mrf.mxu0
        %1169 = vdwg.mxu0
        %1170 = vmatpush.bf16.msra.mxu0 %v870
        %1171 = vmatpush.bf16.msra.mxu0 %v862
        %1172 = vmatpush.bf16.msra.mxu0 %v854
        %1173 = vmatpush.bf16.msra.mxu0 %v846
        %1174 = vmatpush.bf16.msra.mxu0 %v838
        %1175 = vmatpush.bf16.msra.mxu0 %v830
        %1176 = vmatpush.bf16.msra.mxu0 %v822
        %1177 = vmatpush.bf16.msra.mxu0 %v814
        %1178 = vmatmul.bf16.gmra.mxu0 %v296
        %v1179 = vpop.f32.mrf.mxu0
        %v1180 = vadd.f32 0.0, %v1179
        %v1181 = vpop.f32.mrf.mxu0
        %1182 = vdwg.mxu0
        %1183 = vmatpush.bf16.msra.mxu0 %v934
        %1184 = vmatpush.bf16.msra.mxu0 %v926
        %1185 = vmatpush.bf16.msra.mxu0 %v918
        %1186 = vmatpush.bf16.msra.mxu0 %v910
        %1187 = vmatpush.bf16.msra.mxu0 %v902
        %1188 = vmatpush.bf16.msra.mxu0 %v894
        %1189 = vmatpush.bf16.msra.mxu0 %v886
        %1190 = vmatpush.bf16.msra.mxu0 %v878
        %1191 = vmatmul.bf16.gmra.mxu0 %v297
        %v1192 = vpop.f32.mrf.mxu0
        %v1193 = vadd.f32 %v1180, %v1192
        %v1194 = vpop.f32.mrf.mxu0
        %1195 = vdwg.mxu0
        %1196 = vmatpush.bf16.msra.mxu0 %v871
        %1197 = vmatpush.bf16.msra.mxu0 %v863
        %1198 = vmatpush.bf16.msra.mxu0 %v855
        %1199 = vmatpush.bf16.msra.mxu0 %v847
        %1200 = vmatpush.bf16.msra.mxu0 %v839
        %1201 = vmatpush.bf16.msra.mxu0 %v831
        %1202 = vmatpush.bf16.msra.mxu0 %v823
        %1203 = vmatpush.bf16.msra.mxu0 %v815
        %1204 = vmatmul.bf16.gmra.mxu0 %v296
        %v1205 = vpop.f32.mrf.mxu0
        %v1206 = vadd.f32 0.0, %v1205
        %v1207 = vpop.f32.mrf.mxu0
        %1208 = vdwg.mxu0
        %1209 = vmatpush.bf16.msra.mxu0 %v935
        %1210 = vmatpush.bf16.msra.mxu0 %v927
        %1211 = vmatpush.bf16.msra.mxu0 %v919
        %1212 = vmatpush.bf16.msra.mxu0 %v911
        %1213 = vmatpush.bf16.msra.mxu0 %v903
        %1214 = vmatpush.bf16.msra.mxu0 %v895
        %1215 = vmatpush.bf16.msra.mxu0 %v887
        %1216 = vmatpush.bf16.msra.mxu0 %v879
        %1217 = vmatmul.bf16.gmra.mxu0 %v297
        %v1218 = vpop.f32.mrf.mxu0
        %v1219 = vadd.f32 %v1206, %v1218
        %v1220 = vpop.f32.mrf.mxu0
        %1221 = vdwg.mxu0
        %1222 = vmatpush.bf16.msra.mxu0 %v872
        %1223 = vmatpush.bf16.msra.mxu0 %v864
        %1224 = vmatpush.bf16.msra.mxu0 %v856
        %1225 = vmatpush.bf16.msra.mxu0 %v848
        %1226 = vmatpush.bf16.msra.mxu0 %v840
        %1227 = vmatpush.bf16.msra.mxu0 %v832
        %1228 = vmatpush.bf16.msra.mxu0 %v824
        %1229 = vmatpush.bf16.msra.mxu0 %v816
        %1230 = vmatmul.bf16.gmra.mxu0 %v296
        %v1231 = vpop.f32.mrf.mxu0
        %v1232 = vadd.f32 0.0, %v1231
        %v1233 = vpop.f32.mrf.mxu0
        %1234 = vdwg.mxu0
        %1235 = vmatpush.bf16.msra.mxu0 %v936
        %1236 = vmatpush.bf16.msra.mxu0 %v928
        %1237 = vmatpush.bf16.msra.mxu0 %v920
        %1238 = vmatpush.bf16.msra.mxu0 %v912
        %1239 = vmatpush.bf16.msra.mxu0 %v904
        %1240 = vmatpush.bf16.msra.mxu0 %v896
        %1241 = vmatpush.bf16.msra.mxu0 %v888
        %1242 = vmatpush.bf16.msra.mxu0 %v880
        %1243 = vmatmul.bf16.gmra.mxu0 %v297
        %v1244 = vpop.f32.mrf.mxu0
        %v1245 = vadd.f32 %v1232, %v1244
        %v1246 = vpop.f32.mrf.mxu0
        %1247 = vdwg.mxu0
        %1248 = vmatpush.bf16.msra.mxu0 %v873
        %1249 = vmatpush.bf16.msra.mxu0 %v865
        %1250 = vmatpush.bf16.msra.mxu0 %v857
        %1251 = vmatpush.bf16.msra.mxu0 %v849
        %1252 = vmatpush.bf16.msra.mxu0 %v841
        %1253 = vmatpush.bf16.msra.mxu0 %v833
        %1254 = vmatpush.bf16.msra.mxu0 %v825
        %1255 = vmatpush.bf16.msra.mxu0 %v817
        %1256 = vmatmul.bf16.gmra.mxu0 %v296
        %v1257 = vpop.f32.mrf.mxu0
        %v1258 = vadd.f32 0.0, %v1257
        %v1259 = vpop.f32.mrf.mxu0
        %1260 = vdwg.mxu0
        %1261 = vmatpush.bf16.msra.mxu0 %v937
        %1262 = vmatpush.bf16.msra.mxu0 %v929
        %1263 = vmatpush.bf16.msra.mxu0 %v921
        %1264 = vmatpush.bf16.msra.mxu0 %v913
        %1265 = vmatpush.bf16.msra.mxu0 %v905
        %1266 = vmatpush.bf16.msra.mxu0 %v897
        %1267 = vmatpush.bf16.msra.mxu0 %v889
        %1268 = vmatpush.bf16.msra.mxu0 %v881
        %1269 = vmatmul.bf16.gmra.mxu0 %v297
        %v1270 = vpop.f32.mrf.mxu0
        %v1271 = vadd.f32 %v1258, %v1270
        %v1272 = vpop.f32.mrf.mxu0
        %1273 = vdwg.mxu0
        %v1282 = vrot.slane %v1115, 4
        %v1283 = vrot.slane %v1167, 4
        %v1284 = vrot.slane %v1219, 4
        %v1285 = vrot.slane %v1271, 4
        %v1286 = vsel %vm251, %v1089, %v1282
        %v1287 = vsel %vm251, %v1141, %v1283
        %v1288 = vsel %vm251, %v1193, %v1284
        %v1289 = vsel %vm251, %v1245, %v1285
        %1294 = vst [vmem:[%s234] sm:$0x77] %v1286
        %1295 = vst [vmem:[%s234 + $0x8] sm:$0x77] %v1287
        %1296 = vst [vmem:[%s234 + $0x10] sm:$0x77] %v1288
        %1297 = vst [vmem:[%s234 + $0x18] sm:$0x77] %v1289
        %p1298 = scmp.lt.s32.totalorder %s19, 1
        %s1299 = scalar_select %p1298, %s19, 1
        %s1300 = smul.addr %s1299, 8
        %s1301 = smul.addr %s1300, 4
        %s1302 = scalar_lea.vmem %s4, %s1301
        // Predicated region
        $region45: #{tpu_custom_call.1} parent=35 // pred_check
          %p1303 = pneg %p126
        $region46: #{tpu_custom_call.1} parent=35 // pred_check_branch
          %1305 = sbr.rel (%p1303) target = $region48
        $region47: #{tpu_custom_call.1} parent=35 // pred_region
          _
        $region48: #{tpu_custom_call.1} parent=35 // pred_fallthru
          _
      $region36: #{tpu_custom_call.1} parent=5 // pred_fallthru
        _
      %p1306 = scmp.le.s32.totalorder 2, %s14
      // Predicated region
      $region49: #{tpu_custom_call.1} parent=5 // pred_check
        %p1307 = pneg %p1306
      $region50: #{tpu_custom_call.1} parent=5 // pred_check_branch
        %1309 = sbr.rel (%p1307) target = $region52
      $region51: #{tpu_custom_call.1} parent=5 // pred_region
        %s1310 = ssub.s32 %s14, 2
        // Predicated region
        $region53: #{tpu_custom_call.1} parent=51 // pred_check
          %p1311 = pneg %p132
        $region54: #{tpu_custom_call.1} parent=51 // pred_check_branch
          %1313 = sbr.rel (%p1311) target = $region56
        $region55: #{tpu_custom_call.1} parent=51 // pred_region
          %p1314 = scmp.lt.s32.totalorder %s20, 1
          %s1315 = scalar_select %p1314, %s20, 1
          %s1316 = smul.addr %s1315, 8
          %s1317 = smul.addr %s1316, 4
          %s1318 = scalar_lea.vmem %s4, %s1317
        $region56: #{tpu_custom_call.1} parent=51 // pred_fallthru
          _
      $region52: #{tpu_custom_call.1} parent=5 // pred_fallthru
        _
    $region6: #{tpu_custom_call.1} parent=1 // loop_footer
      %s18 = sadd.s32 1, %s14
    $region7: #{tpu_custom_call.1} parent=1 // loop_footer_branch
      %13 = sbr.rel target = $region3
    $region8: #{tpu_custom_call.1} parent=1 // loop_exit
      _
    %1319 = vsyncpa [#allocation3], 1
    %s1320 = scalar_lea.sflag [#allocation3], 1
    %1321 = vsyncpa %s1320, 1
    %1322 = vsyncpa [#allocation5], 1

</llo_original>
